<compile_context>
chip_gen: v6e
topology: v6e:2x2x1
jax: 0.10.0
libtpu: 0.0.40
codegen_flags: <defaults>
</compile_context>

<pallas_src>
import math
import functools

import jax
import jax.numpy as jnp
from jax import lax
from jax.experimental import pallas as pl
from jax.experimental.pallas import tpu as pltpu


def _round_up(x, m):
    return (x + m - 1) // m * m


# ---------------------------------------------------------------------------
# Pallas GEMM kernel: M/N/K-tiled, f32 accumulator, fused activation epilogue.
# ---------------------------------------------------------------------------
def _gemm_kernel(x_ref, w_ref, *refs, activation):
    if activation == "dual_sigmoid":
        lin_ref, sig_ref, acc_ref = refs
    else:
        o_ref, acc_ref = refs

    @pl.when(pl.program_id(2) == 0)
    def _():
        acc_ref[...] = jnp.zeros_like(acc_ref)

    acc_ref[...] += jnp.dot(
        x_ref[...], w_ref[...], preferred_element_type=jnp.float32
    )

    @pl.when(pl.program_id(2) == pl.num_programs(2) - 1)
    def _():
        y = acc_ref[...]
        if activation == "gelu":
            # exact GELU (PyTorch nn.GELU default, approximate='none')
            y = 0.5 * y * (1.0 + lax.erf(y * (1.0 / math.sqrt(2.0))))
            o_ref[...] = y.astype(o_ref.dtype)
        elif activation == "sigmoid":
            o_ref[...] = jax.nn.sigmoid(y).astype(o_ref.dtype)
        elif activation == "dual_sigmoid":
            lin_ref[...] = y.astype(lin_ref.dtype)
            sig_ref[...] = jax.nn.sigmoid(y).astype(sig_ref.dtype)
        else:
            o_ref[...] = y.astype(o_ref.dtype)


def matmul_act(x, w, activation="none"):
    """act(x @ w) with M/N/K tiled on the Pallas grid (bf16 MXU, f32 acc)."""
    M, K = x.shape
    K2, N = w.shape
    assert K == K2

    # bf16 matmul inputs, f32 accumulation (no-op if already bf16).
    x = x.astype(jnp.bfloat16)
    w = w.astype(jnp.bfloat16)

    # Tile sizes: lane axis multiples of 128, sublane multiples of 16 (bf16
    # packing).  128/256 output tiles map well onto v5e/v6e/v7x MXUs; tiny
    # layers collapse to a single tile.
    tm = 256 if M >= 256 else _round_up(M, 16)
    tn = 256 if N >= 256 else _round_up(N, 128)
    tk = 2048 if (K % 2048 == 0) else K  # fat K blocks; full-K for small K

    Mp = _round_up(M, tm)
    Np = _round_up(N, tn)
    if Mp != M:
        x = jnp.pad(x, ((0, Mp - M), (0, 0)))
    if Np != N:
        w = jnp.pad(w, ((0, 0), (0, Np - N)))

    grid = (Mp // tm, Np // tn, K // tk)
    kernel = functools.partial(_gemm_kernel, activation=activation)

    out_block = pl.BlockSpec((tm, tn), lambda i, j, k: (i, j))
    if activation == "dual_sigmoid":
        out_shape = (
            jax.ShapeDtypeStruct((Mp, Np), jnp.float32),
            jax.ShapeDtypeStruct((Mp, Np), jnp.float32),
        )
        out_specs = [out_block, out_block]
        n_outs = 2
    else:
        out_shape = jax.ShapeDtypeStruct((Mp, Np), jnp.float32)
        out_specs = out_block
        n_outs = 1

    has_trans = activation in ("gelu", "sigmoid", "dual_sigmoid")
    cost = pl.CostEstimate(
        flops=2 * Mp * Np * K,
        transcendentals=(Mp * Np if has_trans else 0),
        bytes_accessed=Mp * K * 2 + K * Np * 2 + n_outs * Mp * Np * 4,
    )

    result = pl.pallas_call(
        kernel,
        out_shape=out_shape,
        grid_spec=pltpu.PrefetchScalarGridSpec(
            num_scalar_prefetch=0,
            grid=grid,
            in_specs=[
                pl.BlockSpec((tm, tk), lambda i, j, k: (i, k)),
                pl.BlockSpec((tk, tn), lambda i, j, k: (k, j)),
            ],
            out_specs=out_specs,
            scratch_shapes=[pltpu.VMEM((tm, tn), jnp.float32)],
        ),
        compiler_params=pltpu.CompilerParams(
            dimension_semantics=("parallel", "parallel", "arbitrary"),
        ),
        cost_estimate=cost,
    )(x, w)

    if activation == "dual_sigmoid":
        lin, sig = result
        return lin[:M, :N], sig[:M, :N]
    return result[:M, :N]


# ---------------------------------------------------------------------------
# im2col glue (plain JAX, bf16) + conv wrapper.
# ---------------------------------------------------------------------------
def _im2col(x_nhwc, kh, kw, stride, pad):
    x = jnp.pad(x_nhwc, ((0, 0), (pad, pad), (pad, pad), (0, 0)))
    n, hp, wp, c = x.shape
    oh = (hp - kh) // stride + 1
    ow = (wp - kw) // stride + 1
    cols = []
    for i in range(kh):
        for j in range(kw):
            patch = lax.slice(
                x,
                (0, i, j, 0),
                (n, i + (oh - 1) * stride + 1, j + (ow - 1) * stride + 1, c),
                (1, stride, stride, 1),
            )
            cols.append(patch)  # (n, oh, ow, c)
    patches = jnp.stack(cols, axis=3)  # (n, oh, ow, kh*kw, c)
    return patches.reshape(n * oh * ow, kh * kw * c), (n, oh, ow)


def conv2d(x_nhwc, w, kh, kw, stride, pad, activation="none"):
    """w has shape (kh*kw*cin, cout), matching im2col column order (kh,kw,cin)."""
    x_nhwc = x_nhwc.astype(jnp.bfloat16)  # halve im2col / DMA traffic
    patches, (n, oh, ow) = _im2col(x_nhwc, kh, kw, stride, pad)
    cout = w.shape[1]
    out = matmul_act(patches, w, activation=activation)
    if activation == "dual_sigmoid":
        lin, sig = out
        return lin.reshape(n, oh, ow, cout), sig.reshape(n, oh, ow, cout)
    return out.reshape(n, oh, ow, cout)


# ---------------------------------------------------------------------------
# Deterministic synthetic parameters (bias-free, kaiming-like scale).
# ---------------------------------------------------------------------------
def init_params(key, in_channels, dim=256):
    keys = jax.random.split(key, 5)

    def mk(k, kh, kw, cin, cout):
        fan_in = kh * kw * cin
        std = math.sqrt(2.0 / fan_in)
        return jax.random.normal(k, (kh * kw * cin, cout), jnp.float32) * std

    return {
        "w1": mk(keys[0], 4, 4, in_channels, dim),
        "w2": mk(keys[1], 4, 4, dim, dim),
        "w3": mk(keys[2], 4, 4, dim, dim),
        "w4": mk(keys[3], 4, 4, dim, dim),
        "w5": mk(keys[4], 1, 1, dim, 1),
    }


# ---------------------------------------------------------------------------
# Full forward pass (matches DG_discriminator.forward).
# ---------------------------------------------------------------------------
def dg_discriminator_forward(params, x_nchw, use_sigmoid=True):
    x = jnp.transpose(x_nchw, (0, 2, 3, 1))  # NCHW -> NHWC

    c1 = conv2d(x, params["w1"], 4, 4, 2, 1, "gelu")
    c2 = conv2d(c1, params["w2"], 4, 4, 2, 1, "gelu")
    c3 = conv2d(c2, params["w3"], 4, 4, 2, 1, "gelu")
    c4 = conv2d(c3, params["w4"], 4, 4, 1, 1, "gelu")

    if use_sigmoid:
        # conv5 computed once; linear + sigmoid written by the same epilogue.
        c5, out = conv2d(c4, params["w5"], 1, 1, 1, 0, "dual_sigmoid")
    else:
        c5 = conv2d(c4, params["w5"], 1, 1, 1, 0, "none")
        out = c5

    def to_nchw(a):
        return jnp.transpose(a, (0, 3, 1, 2))

    feats = [to_nchw(c1), to_nchw(c2), to_nchw(c3), to_nchw(c4), to_nchw(c5)]
    return to_nchw(out), feats


if __name__ == "__main__":
    key = jax.random.PRNGKey(0)
    in_channels = 4
    x = jax.random.normal(
        jax.random.fold_in(key, 1), (2, in_channels, 16, 16), jnp.float32
    )
    params = init_params(jax.random.fold_in(key, 2), in_channels)

    outputs, feats = dg_discriminator_forward(params, x, use_sigmoid=True)
    jax.block_until_ready(outputs)
    jax.block_until_ready(feats)

    # shape sanity checks (16 -> 8 -> 4 -> 2 -> 1 -> 1)
    assert outputs.shape == (2, 1, 1, 1), outputs.shape
    assert feats[0].shape == (2, 256, 8, 8)
    assert feats[1].shape == (2, 256, 4, 4)
    assert feats[2].shape == (2, 256, 2, 2)
    assert feats[3].shape == (2, 256, 1, 1)
    assert feats[4].shape == (2, 1, 1, 1)
    assert bool(jnp.all((outputs >= 0.0) & (outputs <= 1.0)))
    # outputs must be sigmoid of conv5 (same accumulator, same kernel).
    assert bool(
        jnp.allclose(outputs, jax.nn.sigmoid(feats[4]), atol=1e-5, rtol=1e-5)
    )

    print("KERNEL_OK")
</pallas_src>

<mosaic_0001>
module attributes {stable_mosaic.version = 11 : i64} {
  func.func @_gemm_kernel(%arg0: i32, %arg1: i32, %arg2: i32, %arg3: memref<128x64xbf16, #tpu.memory_space<vmem>>, %arg4: memref<64x256xbf16, #tpu.memory_space<vmem>>, %arg5: memref<128x256xf32, #tpu.memory_space<vmem>>, %arg6: memref<128x256xf32, #tpu.memory_space<vmem>>) attributes {dimension_semantics = [#tpu.dimension_semantics<parallel>, #tpu.dimension_semantics<parallel>, #tpu.dimension_semantics<arbitrary>], iteration_bounds = array<i64: 1, 1, 1>, scalar_prefetch = 0 : i64, scratch_operands = 1 : i64, tpu.core_type = #tpu.core_type<tc>, window_params = [{transform_indices = @transform_0, window_bounds = array<i64: 128, 64>}, {transform_indices = @transform_1, window_bounds = array<i64: 64, 256>}, {transform_indices = @transform_2, window_bounds = array<i64: 128, 256>}]} {
    %c0_i32 = arith.constant 0 : i32
    %0 = arith.cmpi eq, %arg2, %c0_i32 : i32
    %1 = arith.extui %0 : i1 to i32
    %c0_i32_0 = arith.constant 0 : i32
    %2 = arith.cmpi ne, %1, %c0_i32_0 : i32
    scf.if %2 {
      %cst_10 = arith.constant 0.000000e+00 : f32
      %12 = vector.broadcast %cst_10 : f32 to vector<128x256xf32>
      %c0_11 = arith.constant 0 : index
      %c0_12 = arith.constant 0 : index
      %13 = vector.load %arg6[%c0_11, %c0_12] : memref<128x256xf32, #tpu.memory_space<vmem>>, vector<128x256xf32>
      tpu.vector_store %arg6[%c0_11, %c0_12], %12 {strides = array<i32>} : memref<128x256xf32, #tpu.memory_space<vmem>>, vector<128x256xf32>,
    } else {
    }
    %c0 = arith.constant 0 : index
    %c0_1 = arith.constant 0 : index
    %3 = vector.load %arg6[%c0, %c0_1] : memref<128x256xf32, #tpu.memory_space<vmem>>, vector<128x256xf32>
    %c0_2 = arith.constant 0 : index
    %c0_3 = arith.constant 0 : index
    %4 = vector.load %arg3[%c0_2, %c0_3] : memref<128x64xbf16, #tpu.memory_space<vmem>>, vector<128x64xbf16>
    %c0_4 = arith.constant 0 : index
    %c0_5 = arith.constant 0 : index
    %5 = vector.load %arg4[%c0_4, %c0_5] : memref<64x256xbf16, #tpu.memory_space<vmem>>, vector<64x256xbf16>
    %cst = arith.constant dense<0.000000e+00> : vector<128x256xf32>
    %6 = tpu.matmul %4, %5, %cst {dimension_numbers = #tpu.dot_dimension_numbers<[1], [0], [0], [1], [0, 0, 1, 1], [], []>} : vector<128x64xbf16>, vector<64x256xbf16>, vector<128x256xf32> -> vector<128x256xf32>
    %7 = arith.addf %3, %6 : vector<128x256xf32>
    %c0_6 = arith.constant 0 : index
    %c0_7 = arith.constant 0 : index
    %8 = vector.load %arg6[%c0_6, %c0_7] : memref<128x256xf32, #tpu.memory_space<vmem>>, vector<128x256xf32>
    tpu.vector_store %arg6[%c0_6, %c0_7], %7 {strides = array<i32>} : memref<128x256xf32, #tpu.memory_space<vmem>>, vector<128x256xf32>,
    %c0_i32_8 = arith.constant 0 : i32
    %9 = arith.cmpi eq, %arg2, %c0_i32_8 : i32
    %10 = arith.extui %9 : i1 to i32
    %c0_i32_9 = arith.constant 0 : i32
    %11 = arith.cmpi ne, %10, %c0_i32_9 : i32
    scf.if %11 {
      %c0_10 = arith.constant 0 : index
      %c0_11 = arith.constant 0 : index
      %12 = vector.load %arg6[%c0_10, %c0_11] : memref<128x256xf32, #tpu.memory_space<vmem>>, vector<128x256xf32>
      %cst_12 = arith.constant 5.000000e-01 : f32
      %13 = vector.broadcast %cst_12 : f32 to vector<128x256xf32>
      %14 = arith.mulf %13, %12 : vector<128x256xf32>
      %cst_13 = arith.constant 0.707106769 : f32
      %15 = vector.broadcast %cst_13 : f32 to vector<128x256xf32>
      %16 = arith.mulf %12, %15 : vector<128x256xf32>
      %17 = math.erf %16 : vector<128x256xf32>
      %cst_14 = arith.constant 1.000000e+00 : f32
      %18 = vector.broadcast %cst_14 : f32 to vector<128x256xf32>
      %19 = arith.addf %18, %17 : vector<128x256xf32>
      %20 = arith.mulf %14, %19 : vector<128x256xf32>
      %c0_15 = arith.constant 0 : index
      %c0_16 = arith.constant 0 : index
      %21 = vector.load %arg5[%c0_15, %c0_16] : memref<128x256xf32, #tpu.memory_space<vmem>>, vector<128x256xf32>
      tpu.vector_store %arg5[%c0_15, %c0_16], %20 {strides = array<i32>} : memref<128x256xf32, #tpu.memory_space<vmem>>, vector<128x256xf32>,
    } else {
    }
    return
  }
  func.func @transform_0(%arg0: i32, %arg1: i32, %arg2: i32) -> (i32, i32) {
    %c0_i32 = arith.constant 0 : i32
    return %arg0, %arg2 : i32, i32
  }
  func.func @transform_1(%arg0: i32, %arg1: i32, %arg2: i32) -> (i32, i32) {
    %c0_i32 = arith.constant 0 : i32
    return %arg2, %arg1 : i32, i32
  }
  func.func @transform_2(%arg0: i32, %arg1: i32, %arg2: i32) -> (i32, i32) {
    %c0_i32 = arith.constant 0 : i32
    return %arg0, %arg1 : i32, i32
  }
}

</mosaic_0001>

<llo_original>
// kernel: tpu_custom_call.1
$region0: #{tpu_custom_call.1}
  #allocation0 [shape = 'u32[]', space=smem, size = 0x4, offset = 0x4, fixed_abs, tag = 'smem constant byte address 0x4 - core index']
  #allocation1 [shape = 'u32[144,128]{1,0:T(1,128)}', space=vmem, size = 0x12000, scoped, tag = 'internal scratch']
  #allocation2 [shape = 'f32[128,256]{1,0:T(8,128)}', space=vmem, size = 0x20000, scoped, tag = 'scratch operand']
  %s0 = inlined_call_operand.vmem [shape: bf16[128,64], index: 0, kind: input, shape index: {}]
  %s1 = inlined_call_operand.vmem [shape: bf16[64,256], index: 1, kind: input, shape index: {}]
  %s2 = inlined_call_operand.hbm [shape: f32[128,256], index: 2, kind: output, shape index: {}]
  %s3 = sld [smem:[#allocation0]]
  $region26: #{tpu_custom_call.1} parent=0
    _
  %s5 = ssub.s32 1, %s3
  %s6 = scalar_select 0, %s5, %s3
  $region1: #{tpu_custom_call.1} parent=0
    #allocation3 [shape = 'u8[131072]{0}', space=vmem, size = 0x20000, scoped, tag = 'output window, operand 0, single buffered']
    #allocation4 [shape = 's32[1]{0}', space=sflag, size = 0x4, scoped, tag = 'scoped memory for tpu_custom_call.1']
    %7 = vsyncpa [#allocation4], 0
    // Predicated region
    $region2: #{tpu_custom_call.1} parent=1 // pred_check
      _
    $region3: #{tpu_custom_call.1} parent=1 // pred_check_branch
      %9 = sbr.rel (0) target = $region5
    $region4: #{tpu_custom_call.1} parent=1 // pred_region
      _
    $region5: #{tpu_custom_call.1} parent=1 // pred_fallthru
      _
    // Predicated region
    $region6: #{tpu_custom_call.1} parent=1 // pred_check
      _
    $region7: #{tpu_custom_call.1} parent=1 // pred_check_branch
      %11 = sbr.rel (0) target = $region9
    $region8: #{tpu_custom_call.1} parent=1 // pred_region
      _
    $region9: #{tpu_custom_call.1} parent=1 // pred_fallthru
      _
    %p13 = scmp.eq.s32.totalorder 0, 0
    // Predicated region
    $region10: #{tpu_custom_call.1} parent=1 // pred_check
      %p14 = pneg %p13
    $region11: #{tpu_custom_call.1} parent=1 // pred_check_branch
      %16 = sbr.rel (%p14) target = $region13
    $region12: #{tpu_custom_call.1} parent=1 // pred_region
      %17 = vst [vmem:[#allocation2] sm:$0xff] 0.0
      %18 = vst [vmem:[#allocation2 + $0x8] sm:$0xff] 0.0
      %19 = vst [vmem:[#allocation2 + $0x10] sm:$0xff] 0.0
      %20 = vst [vmem:[#allocation2 + $0x18] sm:$0xff] 0.0
      %21 = vst [vmem:[#allocation2 + $0x20] sm:$0xff] 0.0
      %22 = vst [vmem:[#allocation2 + $0x28] sm:$0xff] 0.0
      %23 = vst [vmem:[#allocation2 + $0x30] sm:$0xff] 0.0
      %24 = vst [vmem:[#allocation2 + $0x38] sm:$0xff] 0.0
      %25 = vst [vmem:[#allocation2 + $0x40] sm:$0xff] 0.0
      %26 = vst [vmem:[#allocation2 + $0x48] sm:$0xff] 0.0
      %27 = vst [vmem:[#allocation2 + $0x50] sm:$0xff] 0.0
      %28 = vst [vmem:[#allocation2 + $0x58] sm:$0xff] 0.0
      %29 = vst [vmem:[#allocation2 + $0x60] sm:$0xff] 0.0
      %30 = vst [vmem:[#allocation2 + $0x68] sm:$0xff] 0.0
      %31 = vst [vmem:[#allocation2 + $0x70] sm:$0xff] 0.0
      %32 = vst [vmem:[#allocation2 + $0x78] sm:$0xff] 0.0
      %33 = vst [vmem:[#allocation2 + $0x80] sm:$0xff] 0.0
      %34 = vst [vmem:[#allocation2 + $0x88] sm:$0xff] 0.0
      %35 = vst [vmem:[#allocation2 + $0x90] sm:$0xff] 0.0
      %36 = vst [vmem:[#allocation2 + $0x98] sm:$0xff] 0.0
      %37 = vst [vmem:[#allocation2 + $0xa0] sm:$0xff] 0.0
      %38 = vst [vmem:[#allocation2 + $0xa8] sm:$0xff] 0.0
      %39 = vst [vmem:[#allocation2 + $0xb0] sm:$0xff] 0.0
      %40 = vst [vmem:[#allocation2 + $0xb8] sm:$0xff] 0.0
      %41 = vst [vmem:[#allocation2 + $0xc0] sm:$0xff] 0.0
      %42 = vst [vmem:[#allocation2 + $0xc8] sm:$0xff] 0.0
      %43 = vst [vmem:[#allocation2 + $0xd0] sm:$0xff] 0.0
      %44 = vst [vmem:[#allocation2 + $0xd8] sm:$0xff] 0.0
      %45 = vst [vmem:[#allocation2 + $0xe0] sm:$0xff] 0.0
      %46 = vst [vmem:[#allocation2 + $0xe8] sm:$0xff] 0.0
      %47 = vst [vmem:[#allocation2 + $0xf0] sm:$0xff] 0.0
      %48 = vst [vmem:[#allocation2 + $0xf8] sm:$0xff] 0.0
    $region13: #{tpu_custom_call.1} parent=1 // pred_fallthru
      _
    %v49 = vld [vmem:[#allocation2] sm:$0xff]
    %v50 = vld [vmem:[#allocation2 + $0x8] sm:$0xff]
    %v51 = vld [vmem:[#allocation2 + $0x10] sm:$0xff]
    %v52 = vld [vmem:[#allocation2 + $0x18] sm:$0xff]
    %v53 = vld [vmem:[#allocation2 + $0x20] sm:$0xff]
    %v54 = vld [vmem:[#allocation2 + $0x28] sm:$0xff]
    %v55 = vld [vmem:[#allocation2 + $0x30] sm:$0xff]
    %v56 = vld [vmem:[#allocation2 + $0x38] sm:$0xff]
    %v57 = vld [vmem:[#allocation2 + $0x40] sm:$0xff]
    %v58 = vld [vmem:[#allocation2 + $0x48] sm:$0xff]
    %v59 = vld [vmem:[#allocation2 + $0x50] sm:$0xff]
    %v60 = vld [vmem:[#allocation2 + $0x58] sm:$0xff]
    %v61 = vld [vmem:[#allocation2 + $0x60] sm:$0xff]
    %v62 = vld [vmem:[#allocation2 + $0x68] sm:$0xff]
    %v63 = vld [vmem:[#allocation2 + $0x70] sm:$0xff]
    %v64 = vld [vmem:[#allocation2 + $0x78] sm:$0xff]
    %v65 = vld [vmem:[#allocation2 + $0x80] sm:$0xff]
    %v66 = vld [vmem:[#allocation2 + $0x88] sm:$0xff]
    %v67 = vld [vmem:[#allocation2 + $0x90] sm:$0xff]
    %v68 = vld [vmem:[#allocation2 + $0x98] sm:$0xff]
    %v69 = vld [vmem:[#allocation2 + $0xa0] sm:$0xff]
    %v70 = vld [vmem:[#allocation2 + $0xa8] sm:$0xff]
    %v71 = vld [vmem:[#allocation2 + $0xb0] sm:$0xff]
    %v72 = vld [vmem:[#allocation2 + $0xb8] sm:$0xff]
    %v73 = vld [vmem:[#allocation2 + $0xc0] sm:$0xff]
    %v74 = vld [vmem:[#allocation2 + $0xc8] sm:$0xff]
    %v75 = vld [vmem:[#allocation2 + $0xd0] sm:$0xff]
    %v76 = vld [vmem:[#allocation2 + $0xd8] sm:$0xff]
    %v77 = vld [vmem:[#allocation2 + $0xe0] sm:$0xff]
    %v78 = vld [vmem:[#allocation2 + $0xe8] sm:$0xff]
    %v79 = vld [vmem:[#allocation2 + $0xf0] sm:$0xff]
    %v80 = vld [vmem:[#allocation2 + $0xf8] sm:$0xff]
    %v81 = vld [vmem:[%s0] sm:$0xf]
    %v82 = vld [vmem:[%s0 + $0x4] sm:$0xf]
    %v83 = vld [vmem:[%s0 + $0x8] sm:$0xf]
    %v84 = vld [vmem:[%s0 + $0xc] sm:$0xf]
    %v85 = vld [vmem:[%s0 + $0x10] sm:$0xf]
    %v86 = vld [vmem:[%s0 + $0x14] sm:$0xf]
    %v87 = vld [vmem:[%s0 + $0x18] sm:$0xf]
    %v88 = vld [vmem:[%s0 + $0x1c] sm:$0xf]
    %v89 = vld [vmem:[%s0 + $0x20] sm:$0xf]
    %v90 = vld [vmem:[%s0 + $0x24] sm:$0xf]
    %v91 = vld [vmem:[%s0 + $0x28] sm:$0xf]
    %v92 = vld [vmem:[%s0 + $0x2c] sm:$0xf]
    %v93 = vld [vmem:[%s0 + $0x30] sm:$0xf]
    %v94 = vld [vmem:[%s0 + $0x34] sm:$0xf]
    %v95 = vld [vmem:[%s0 + $0x38] sm:$0xf]
    %v96 = vld [vmem:[%s0 + $0x3c] sm:$0xf]
    %v97 = vld [vmem:[%s1] sm:$0xff]
    %v98 = vld [vmem:[%s1 + $0x8] sm:$0xff]
    %v99 = vld [vmem:[%s1 + $0x10] sm:$0xff]
    %v100 = vld [vmem:[%s1 + $0x18] sm:$0xff]
    %v101 = vld [vmem:[%s1 + $0x20] sm:$0xff]
    %v102 = vld [vmem:[%s1 + $0x28] sm:$0xff]
    %v103 = vld [vmem:[%s1 + $0x30] sm:$0xff]
    %v104 = vld [vmem:[%s1 + $0x38] sm:$0xff]
    %v121 = vunpack.c.l.b16 %v81
    %v122 = vunpack.c.l.b16 %v82
    %v123 = vunpack.c.l.b16 %v83
    %v124 = vunpack.c.l.b16 %v84
    %v125 = vunpack.c.l.b16 %v85
    %v126 = vunpack.c.l.b16 %v86
    %v127 = vunpack.c.l.b16 %v87
    %v128 = vunpack.c.l.b16 %v88
    %v129 = vunpack.c.l.b16 %v89
    %v130 = vunpack.c.l.b16 %v90
    %v131 = vunpack.c.l.b16 %v91
    %v132 = vunpack.c.l.b16 %v92
    %v133 = vunpack.c.l.b16 %v93
    %v134 = vunpack.c.l.b16 %v94
    %v135 = vunpack.c.l.b16 %v95
    %v136 = vunpack.c.l.b16 %v96
    %v137 = vpack.c.b16 %v122, %v121
    %v138 = vpack.c.b16 %v124, %v123
    %v139 = vpack.c.b16 %v126, %v125
    %v140 = vpack.c.b16 %v128, %v127
    %v141 = vpack.c.b16 %v130, %v129
    %v142 = vpack.c.b16 %v132, %v131
    %v143 = vpack.c.b16 %v134, %v133
    %v144 = vpack.c.b16 %v136, %v135
    %v153 = vunpack.c.l.b16 %v97
    %v154 = vunpack.c.h.b16 %v97
    %v155 = vunpack.c.l.b16 %v98
    %v156 = vunpack.c.h.b16 %v98
    %v157 = vunpack.c.l.b16 %v99
    %v158 = vunpack.c.h.b16 %v99
    %v159 = vunpack.c.l.b16 %v100
    %v160 = vunpack.c.h.b16 %v100
    %v161 = vunpack.c.l.b16 %v101
    %v162 = vunpack.c.h.b16 %v101
    %v163 = vunpack.c.l.b16 %v102
    %v164 = vunpack.c.h.b16 %v102
    %v165 = vunpack.c.l.b16 %v103
    %v166 = vunpack.c.h.b16 %v103
    %v167 = vunpack.c.l.b16 %v104
    %v168 = vunpack.c.h.b16 %v104
    %v169 = vpack.c.b16 %v155, %v153
    %v170 = vpack.c.b16 %v156, %v154
    %v171 = vpack.c.b16 %v159, %v157
    %v172 = vpack.c.b16 %v160, %v158
    %v173 = vpack.c.b16 %v163, %v161
    %v174 = vpack.c.b16 %v164, %v162
    %v175 = vpack.c.b16 %v167, %v165
    %v176 = vpack.c.b16 %v168, %v166
    %vm185 = vcmask 523264
    %v187 = vsel %vm185, %v137, 0
    %v190 = vsel %vm185, %v138, 0
    %v193 = vsel %vm185, %v139, 0
    %v196 = vsel %vm185, %v140, 0
    %v199 = vsel %vm185, %v141, 0
    %v202 = vsel %vm185, %v142, 0
    %v205 = vsel %vm185, %v143, 0
    %v208 = vsel %vm185, %v144, 0
    %210 = vmatprep.subr.bf16.mxu0 0
    %211 = vmatpush1.bf16.msra.mxu0 0
    %212 = vmatprep.subr.bf16.mxu0 0
    %213 = vmatpush1.bf16.msra.mxu0 0
    %214 = vmatprep.subr.bf16.mxu0 0
    %215 = vmatpush1.bf16.msra.mxu0 0
    %216 = vmatprep.subr.bf16.mxu0 0
    %217 = vmatpush1.bf16.msra.mxu0 0
    %218 = vmatprep.subr.bf16.mxu0 %v176
    %219 = vmatpush1.bf16.msra.mxu0 %v175
    %220 = vmatprep.subr.bf16.mxu0 %v174
    %221 = vmatpush1.bf16.msra.mxu0 %v173
    %222 = vmatprep.subr.bf16.mxu0 %v172
    %223 = vmatpush1.bf16.msra.mxu0 %v171
    %224 = vmatprep.subr.bf16.mxu0 %v170
    %225 = vmatpush1.bf16.msra.mxu0 %v169
    %226 = vmatprep.subr.bf16.mxu0 0
    %227 = vmatpush2.bf16.msra.mxu0 0
    %228 = vmatprep.subr.bf16.mxu0 0
    %229 = vmatpush2.bf16.msra.mxu0 0
    %230 = vmatprep.subr.bf16.mxu0 0
    %231 = vmatpush2.bf16.msra.mxu0 0
    %232 = vmatprep.subr.bf16.mxu0 0
    %233 = vmatpush2.bf16.msra.mxu0 0
    %234 = vmatprep.subr.bf16.mxu0 0
    %235 = vmatpush2.bf16.msra.mxu0 0
    %236 = vmatprep.subr.bf16.mxu0 0
    %237 = vmatpush2.bf16.msra.mxu0 0
    %238 = vmatprep.subr.bf16.mxu0 0
    %239 = vmatpush2.bf16.msra.mxu0 0
    %240 = vmatprep.subr.bf16.mxu0 0
    %241 = vmatpush2.bf16.msra.mxu0 0
    %242 = vmatprep.mubr.bf16.mxu0 0
    %243 = vmatmul.mubr.bf16.gmra.mxu0 %v187
    %v244 = vpop.f32.mrf.mxu0
    %v245 = vadd.f32 0.0, %v244
    %v246 = vpop.f32.mrf.mxu0
    %v247 = vadd.f32 0.0, %v246
    %v248 = vpop.f32.mrf.mxu0
    %v249 = vadd.f32 0.0, %v248
    %v250 = vpop.f32.mrf.mxu0
    %v251 = vadd.f32 0.0, %v250
    %252 = vmatprep.mubr.bf16.mxu0 0
    %253 = vmatmul.mubr.bf16.gmra.mxu0 %v190
    %v254 = vpop.f32.mrf.mxu0
    %v255 = vadd.f32 0.0, %v254
    %v256 = vpop.f32.mrf.mxu0
    %v257 = vadd.f32 0.0, %v256
    %v258 = vpop.f32.mrf.mxu0
    %v259 = vadd.f32 0.0, %v258
    %v260 = vpop.f32.mrf.mxu0
    %v261 = vadd.f32 0.0, %v260
    %262 = vmatprep.mubr.bf16.mxu0 0
    %263 = vmatmul.mubr.bf16.gmra.mxu0 %v193
    %v264 = vpop.f32.mrf.mxu0
    %v265 = vadd.f32 0.0, %v264
    %v266 = vpop.f32.mrf.mxu0
    %v267 = vadd.f32 0.0, %v266
    %v268 = vpop.f32.mrf.mxu0
    %v269 = vadd.f32 0.0, %v268
    %v270 = vpop.f32.mrf.mxu0
    %v271 = vadd.f32 0.0, %v270
    %272 = vmatprep.mubr.bf16.mxu0 0
    %273 = vmatmul.mubr.bf16.gmra.mxu0 %v196
    %v274 = vpop.f32.mrf.mxu0
    %v275 = vadd.f32 0.0, %v274
    %v276 = vpop.f32.mrf.mxu0
    %v277 = vadd.f32 0.0, %v276
    %v278 = vpop.f32.mrf.mxu0
    %v279 = vadd.f32 0.0, %v278
    %v280 = vpop.f32.mrf.mxu0
    %v281 = vadd.f32 0.0, %v280
    %282 = vmatprep.mubr.bf16.mxu0 0
    %283 = vmatmul.mubr.bf16.gmra.mxu0 %v199
    %v284 = vpop.f32.mrf.mxu0
    %v285 = vadd.f32 0.0, %v284
    %v286 = vpop.f32.mrf.mxu0
    %v287 = vadd.f32 0.0, %v286
    %v288 = vpop.f32.mrf.mxu0
    %v289 = vadd.f32 0.0, %v288
    %v290 = vpop.f32.mrf.mxu0
    %v291 = vadd.f32 0.0, %v290
    %292 = vmatprep.mubr.bf16.mxu0 0
    %293 = vmatmul.mubr.bf16.gmra.mxu0 %v202
    %v294 = vpop.f32.mrf.mxu0
    %v295 = vadd.f32 0.0, %v294
    %v296 = vpop.f32.mrf.mxu0
    %v297 = vadd.f32 0.0, %v296
    %v298 = vpop.f32.mrf.mxu0
    %v299 = vadd.f32 0.0, %v298
    %v300 = vpop.f32.mrf.mxu0
    %v301 = vadd.f32 0.0, %v300
    %302 = vmatprep.mubr.bf16.mxu0 0
    %303 = vmatmul.mubr.bf16.gmra.mxu0 %v205
    %v304 = vpop.f32.mrf.mxu0
    %v305 = vadd.f32 0.0, %v304
    %v306 = vpop.f32.mrf.mxu0
    %v307 = vadd.f32 0.0, %v306
    %v308 = vpop.f32.mrf.mxu0
    %v309 = vadd.f32 0.0, %v308
    %v310 = vpop.f32.mrf.mxu0
    %v311 = vadd.f32 0.0, %v310
    %312 = vmatprep.mubr.bf16.mxu0 0
    %313 = vmatmul.mubr.bf16.gmra.mxu0 %v208
    %v314 = vpop.f32.mrf.mxu0
    %v315 = vadd.f32 0.0, %v314
    %v316 = vpop.f32.mrf.mxu0
    %v317 = vadd.f32 0.0, %v316
    %v318 = vpop.f32.mrf.mxu0
    %v319 = vadd.f32 0.0, %v318
    %v320 = vpop.f32.mrf.mxu0
    %v321 = vadd.f32 0.0, %v320
    %322 = vdwg.mxu0
    %v323 = vadd.f32 %v49, %v245
    %v324 = vadd.f32 %v50, %v247
    %v325 = vadd.f32 %v51, %v249
    %v326 = vadd.f32 %v52, %v251
    %v327 = vadd.f32 %v53, %v255
    %v328 = vadd.f32 %v54, %v257
    %v329 = vadd.f32 %v55, %v259
    %v330 = vadd.f32 %v56, %v261
    %v331 = vadd.f32 %v57, %v265
    %v332 = vadd.f32 %v58, %v267
    %v333 = vadd.f32 %v59, %v269
    %v334 = vadd.f32 %v60, %v271
    %v335 = vadd.f32 %v61, %v275
    %v336 = vadd.f32 %v62, %v277
    %v337 = vadd.f32 %v63, %v279
    %v338 = vadd.f32 %v64, %v281
    %v339 = vadd.f32 %v65, %v285
    %v340 = vadd.f32 %v66, %v287
    %v341 = vadd.f32 %v67, %v289
    %v342 = vadd.f32 %v68, %v291
    %v343 = vadd.f32 %v69, %v295
    %v344 = vadd.f32 %v70, %v297
    %v345 = vadd.f32 %v71, %v299
    %v346 = vadd.f32 %v72, %v301
    %v347 = vadd.f32 %v73, %v305
    %v348 = vadd.f32 %v74, %v307
    %v349 = vadd.f32 %v75, %v309
    %v350 = vadd.f32 %v76, %v311
    %v351 = vadd.f32 %v77, %v315
    %v352 = vadd.f32 %v78, %v317
    %v353 = vadd.f32 %v79, %v319
    %v354 = vadd.f32 %v80, %v321
    %355 = vst [vmem:[#allocation2] sm:$0xff] %v323
    %356 = vst [vmem:[#allocation2 + $0x8] sm:$0xff] %v324
    %357 = vst [vmem:[#allocation2 + $0x10] sm:$0xff] %v325
    %358 = vst [vmem:[#allocation2 + $0x18] sm:$0xff] %v326
    %359 = vst [vmem:[#allocation2 + $0x20] sm:$0xff] %v327
    %360 = vst [vmem:[#allocation2 + $0x28] sm:$0xff] %v328
    %361 = vst [vmem:[#allocation2 + $0x30] sm:$0xff] %v329
    %362 = vst [vmem:[#allocation2 + $0x38] sm:$0xff] %v330
    %363 = vst [vmem:[#allocation2 + $0x40] sm:$0xff] %v331
    %364 = vst [vmem:[#allocation2 + $0x48] sm:$0xff] %v332
    %365 = vst [vmem:[#allocation2 + $0x50] sm:$0xff] %v333
    %366 = vst [vmem:[#allocation2 + $0x58] sm:$0xff] %v334
    %367 = vst [vmem:[#allocation2 + $0x60] sm:$0xff] %v335
    %368 = vst [vmem:[#allocation2 + $0x68] sm:$0xff] %v336
    %369 = vst [vmem:[#allocation2 + $0x70] sm:$0xff] %v337
    %370 = vst [vmem:[#allocation2 + $0x78] sm:$0xff] %v338
    %371 = vst [vmem:[#allocation2 + $0x80] sm:$0xff] %v339
    %372 = vst [vmem:[#allocation2 + $0x88] sm:$0xff] %v340
    %373 = vst [vmem:[#allocation2 + $0x90] sm:$0xff] %v341
    %374 = vst [vmem:[#allocation2 + $0x98] sm:$0xff] %v342
    %375 = vst [vmem:[#allocation2 + $0xa0] sm:$0xff] %v343
    %376 = vst [vmem:[#allocation2 + $0xa8] sm:$0xff] %v344
    %377 = vst [vmem:[#allocation2 + $0xb0] sm:$0xff] %v345
    %378 = vst [vmem:[#allocation2 + $0xb8] sm:$0xff] %v346
    %379 = vst [vmem:[#allocation2 + $0xc0] sm:$0xff] %v347
    %380 = vst [vmem:[#allocation2 + $0xc8] sm:$0xff] %v348
    %381 = vst [vmem:[#allocation2 + $0xd0] sm:$0xff] %v349
    %382 = vst [vmem:[#allocation2 + $0xd8] sm:$0xff] %v350
    %383 = vst [vmem:[#allocation2 + $0xe0] sm:$0xff] %v351
    %384 = vst [vmem:[#allocation2 + $0xe8] sm:$0xff] %v352
    %385 = vst [vmem:[#allocation2 + $0xf0] sm:$0xff] %v353
    %386 = vst [vmem:[#allocation2 + $0xf8] sm:$0xff] %v354
    // Predicated region
    $region14: #{tpu_custom_call.1} parent=1 // pred_check
      %p387 = pneg %p13
    $region15: #{tpu_custom_call.1} parent=1 // pred_check_branch
      %389 = sbr.rel (%p387) target = $region17
    $region16: #{tpu_custom_call.1} parent=1 // pred_region
      %v390 = vld [vmem:[#allocation2] sm:$0xff]
      %v391 = vld [vmem:[#allocation2 + $0x8] sm:$0xff]
      %v392 = vld [vmem:[#allocation2 + $0x10] sm:$0xff]
      %v393 = vld [vmem:[#allocation2 + $0x18] sm:$0xff]
      %v394 = vld [vmem:[#allocation2 + $0x20] sm:$0xff]
      %v395 = vld [vmem:[#allocation2 + $0x28] sm:$0xff]
      %v396 = vld [vmem:[#allocation2 + $0x30] sm:$0xff]
      %v397 = vld [vmem:[#allocation2 + $0x38] sm:$0xff]
      %v398 = vld [vmem:[#allocation2 + $0x40] sm:$0xff]
      %v399 = vld [vmem:[#allocation2 + $0x48] sm:$0xff]
      %v400 = vld [vmem:[#allocation2 + $0x50] sm:$0xff]
      %v401 = vld [vmem:[#allocation2 + $0x58] sm:$0xff]
      %v402 = vld [vmem:[#allocation2 + $0x60] sm:$0xff]
      %v403 = vld [vmem:[#allocation2 + $0x68] sm:$0xff]
      %v404 = vld [vmem:[#allocation2 + $0x70] sm:$0xff]
      %v405 = vld [vmem:[#allocation2 + $0x78] sm:$0xff]
      %v406 = vld [vmem:[#allocation2 + $0x80] sm:$0xff]
      %v407 = vld [vmem:[#allocation2 + $0x88] sm:$0xff]
      %v408 = vld [vmem:[#allocation2 + $0x90] sm:$0xff]
      %v409 = vld [vmem:[#allocation2 + $0x98] sm:$0xff]
      %v410 = vld [vmem:[#allocation2 + $0xa0] sm:$0xff]
      %v411 = vld [vmem:[#allocation2 + $0xa8] sm:$0xff]
      %v412 = vld [vmem:[#allocation2 + $0xb0] sm:$0xff]
      %v413 = vld [vmem:[#allocation2 + $0xb8] sm:$0xff]
      %v414 = vld [vmem:[#allocation2 + $0xc0] sm:$0xff]
      %v415 = vld [vmem:[#allocation2 + $0xc8] sm:$0xff]
      %v416 = vld [vmem:[#allocation2 + $0xd0] sm:$0xff]
      %v417 = vld [vmem:[#allocation2 + $0xd8] sm:$0xff]
      %v418 = vld [vmem:[#allocation2 + $0xe0] sm:$0xff]
      %v419 = vld [vmem:[#allocation2 + $0xe8] sm:$0xff]
      %v420 = vld [vmem:[#allocation2 + $0xf0] sm:$0xff]
      %v421 = vld [vmem:[#allocation2 + $0xf8] sm:$0xff]
      %v422 = vmul.f32 %v390, 0.5
      %v423 = vmul.f32 %v391, 0.5
      %v424 = vmul.f32 %v392, 0.5
      %v425 = vmul.f32 %v393, 0.5
      %v426 = vmul.f32 %v394, 0.5
      %v427 = vmul.f32 %v395, 0.5
      %v428 = vmul.f32 %v396, 0.5
      %v429 = vmul.f32 %v397, 0.5
      %v430 = vmul.f32 %v398, 0.5
      %v431 = vmul.f32 %v399, 0.5
      %v432 = vmul.f32 %v400, 0.5
      %v433 = vmul.f32 %v401, 0.5
      %v434 = vmul.f32 %v402, 0.5
      %v435 = vmul.f32 %v403, 0.5
      %v436 = vmul.f32 %v404, 0.5
      %v437 = vmul.f32 %v405, 0.5
      %v438 = vmul.f32 %v406, 0.5
      %v439 = vmul.f32 %v407, 0.5
      %v440 = vmul.f32 %v408, 0.5
      %v441 = vmul.f32 %v409, 0.5
      %v442 = vmul.f32 %v410, 0.5
      %v443 = vmul.f32 %v411, 0.5
      %v444 = vmul.f32 %v412, 0.5
      %v445 = vmul.f32 %v413, 0.5
      %v446 = vmul.f32 %v414, 0.5
      %v447 = vmul.f32 %v415, 0.5
      %v448 = vmul.f32 %v416, 0.5
      %v449 = vmul.f32 %v417, 0.5
      %v450 = vmul.f32 %v418, 0.5
      %v451 = vmul.f32 %v419, 0.5
      %v452 = vmul.f32 %v420, 0.5
      %v453 = vmul.f32 %v421, 0.5
      %v454 = vmul.f32 %v390, 0.70710677
      %v455 = vmul.f32 %v391, 0.70710677
      %v456 = vmul.f32 %v392, 0.70710677
      %v457 = vmul.f32 %v393, 0.70710677
      %v458 = vmul.f32 %v394, 0.70710677
      %v459 = vmul.f32 %v395, 0.70710677
      %v460 = vmul.f32 %v396, 0.70710677
      %v461 = vmul.f32 %v397, 0.70710677
      %v462 = vmul.f32 %v398, 0.70710677
      %v463 = vmul.f32 %v399, 0.70710677
      %v464 = vmul.f32 %v400, 0.70710677
      %v465 = vmul.f32 %v401, 0.70710677
      %v466 = vmul.f32 %v402, 0.70710677
      %v467 = vmul.f32 %v403, 0.70710677
      %v468 = vmul.f32 %v404, 0.70710677
      %v469 = vmul.f32 %v405, 0.70710677
      %v470 = vmul.f32 %v406, 0.70710677
      %v471 = vmul.f32 %v407, 0.70710677
      %v472 = vmul.f32 %v408, 0.70710677
      %v473 = vmul.f32 %v409, 0.70710677
      %v474 = vmul.f32 %v410, 0.70710677
      %v475 = vmul.f32 %v411, 0.70710677
      %v476 = vmul.f32 %v412, 0.70710677
      %v477 = vmul.f32 %v413, 0.70710677
      %v478 = vmul.f32 %v414, 0.70710677
      %v479 = vmul.f32 %v415, 0.70710677
      %v480 = vmul.f32 %v416, 0.70710677
      %v481 = vmul.f32 %v417, 0.70710677
      %v482 = vmul.f32 %v418, 0.70710677
      %v483 = vmul.f32 %v419, 0.70710677
      %v484 = vmul.f32 %v420, 0.70710677
      %v485 = vmul.f32 %v421, 0.70710677
      %v486 = verf.f32.pop %v454
      %v487 = verf.f32.pop %v455
      %v488 = verf.f32.pop %v456
      %v489 = verf.f32.pop %v457
      %v490 = verf.f32.pop %v458
      %v491 = verf.f32.pop %v459
      %v492 = verf.f32.pop %v460
      %v493 = verf.f32.pop %v461
      %v494 = verf.f32.pop %v462
      %v495 = verf.f32.pop %v463
      %v496 = verf.f32.pop %v464
      %v497 = verf.f32.pop %v465
      %v498 = verf.f32.pop %v466
      %v499 = verf.f32.pop %v467
      %v500 = verf.f32.pop %v468
      %v501 = verf.f32.pop %v469
      %v502 = verf.f32.pop %v470
      %v503 = verf.f32.pop %v471
      %v504 = verf.f32.pop %v472
      %v505 = verf.f32.pop %v473
      %v506 = verf.f32.pop %v474
      %v507 = verf.f32.pop %v475
      %v508 = verf.f32.pop %v476
      %v509 = verf.f32.pop %v477
      %v510 = verf.f32.pop %v478
      %v511 = verf.f32.pop %v479
      %v512 = verf.f32.pop %v480
      %v513 = verf.f32.pop %v481
      %v514 = verf.f32.pop %v482
      %v515 = verf.f32.pop %v483
      %v516 = verf.f32.pop %v484
      %v517 = verf.f32.pop %v485
      %v518 = vadd.f32 %v486, 1.0
      %v519 = vadd.f32 %v487, 1.0
      %v520 = vadd.f32 %v488, 1.0
      %v521 = vadd.f32 %v489, 1.0
      %v522 = vadd.f32 %v490, 1.0
      %v523 = vadd.f32 %v491, 1.0
      %v524 = vadd.f32 %v492, 1.0
      %v525 = vadd.f32 %v493, 1.0
      %v526 = vadd.f32 %v494, 1.0
      %v527 = vadd.f32 %v495, 1.0
      %v528 = vadd.f32 %v496, 1.0
      %v529 = vadd.f32 %v497, 1.0
      %v530 = vadd.f32 %v498, 1.0
      %v531 = vadd.f32 %v499, 1.0
      %v532 = vadd.f32 %v500, 1.0
      %v533 = vadd.f32 %v501, 1.0
      %v534 = vadd.f32 %v502, 1.0
      %v535 = vadd.f32 %v503, 1.0
      %v536 = vadd.f32 %v504, 1.0
      %v537 = vadd.f32 %v505, 1.0
      %v538 = vadd.f32 %v506, 1.0
      %v539 = vadd.f32 %v507, 1.0
      %v540 = vadd.f32 %v508, 1.0
      %v541 = vadd.f32 %v509, 1.0
      %v542 = vadd.f32 %v510, 1.0
      %v543 = vadd.f32 %v511, 1.0
      %v544 = vadd.f32 %v512, 1.0
      %v545 = vadd.f32 %v513, 1.0
      %v546 = vadd.f32 %v514, 1.0
      %v547 = vadd.f32 %v515, 1.0
      %v548 = vadd.f32 %v516, 1.0
      %v549 = vadd.f32 %v517, 1.0
      %v550 = vmul.f32 %v422, %v518
      %v551 = vmul.f32 %v423, %v519
      %v552 = vmul.f32 %v424, %v520
      %v553 = vmul.f32 %v425, %v521
      %v554 = vmul.f32 %v426, %v522
      %v555 = vmul.f32 %v427, %v523
      %v556 = vmul.f32 %v428, %v524
      %v557 = vmul.f32 %v429, %v525
      %v558 = vmul.f32 %v430, %v526
      %v559 = vmul.f32 %v431, %v527
      %v560 = vmul.f32 %v432, %v528
      %v561 = vmul.f32 %v433, %v529
      %v562 = vmul.f32 %v434, %v530
      %v563 = vmul.f32 %v435, %v531
      %v564 = vmul.f32 %v436, %v532
      %v565 = vmul.f32 %v437, %v533
      %v566 = vmul.f32 %v438, %v534
      %v567 = vmul.f32 %v439, %v535
      %v568 = vmul.f32 %v440, %v536
      %v569 = vmul.f32 %v441, %v537
      %v570 = vmul.f32 %v442, %v538
      %v571 = vmul.f32 %v443, %v539
      %v572 = vmul.f32 %v444, %v540
      %v573 = vmul.f32 %v445, %v541
      %v574 = vmul.f32 %v446, %v542
      %v575 = vmul.f32 %v447, %v543
      %v576 = vmul.f32 %v448, %v544
      %v577 = vmul.f32 %v449, %v545
      %v578 = vmul.f32 %v450, %v546
      %v579 = vmul.f32 %v451, %v547
      %v580 = vmul.f32 %v452, %v548
      %v581 = vmul.f32 %v453, %v549
      %582 = vst [vmem:[#allocation3] sm:$0xff] %v550
      %583 = vst [vmem:[#allocation3 + $0x8] sm:$0xff] %v551
      %584 = vst [vmem:[#allocation3 + $0x10] sm:$0xff] %v552
      %585 = vst [vmem:[#allocation3 + $0x18] sm:$0xff] %v553
      %586 = vst [vmem:[#allocation3 + $0x20] sm:$0xff] %v554
      %587 = vst [vmem:[#allocation3 + $0x28] sm:$0xff] %v555
      %588 = vst [vmem:[#allocation3 + $0x30] sm:$0xff] %v556
      %589 = vst [vmem:[#allocation3 + $0x38] sm:$0xff] %v557
      %590 = vst [vmem:[#allocation3 + $0x40] sm:$0xff] %v558
      %591 = vst [vmem:[#allocation3 + $0x48] sm:$0xff] %v559
      %592 = vst [vmem:[#allocation3 + $0x50] sm:$0xff] %v560
      %593 = vst [vmem:[#allocation3 + $0x58] sm:$0xff] %v561
      %594 = vst [vmem:[#allocation3 + $0x60] sm:$0xff] %v562
      %595 = vst [vmem:[#allocation3 + $0x68] sm:$0xff] %v563
      %596 = vst [vmem:[#allocation3 + $0x70] sm:$0xff] %v564
      %597 = vst [vmem:[#allocation3 + $0x78] sm:$0xff] %v565
      %598 = vst [vmem:[#allocation3 + $0x80] sm:$0xff] %v566
      %599 = vst [vmem:[#allocation3 + $0x88] sm:$0xff] %v567
      %600 = vst [vmem:[#allocation3 + $0x90] sm:$0xff] %v568
      %601 = vst [vmem:[#allocation3 + $0x98] sm:$0xff] %v569
      %602 = vst [vmem:[#allocation3 + $0xa0] sm:$0xff] %v570
      %603 = vst [vmem:[#allocation3 + $0xa8] sm:$0xff] %v571
      %604 = vst [vmem:[#allocation3 + $0xb0] sm:$0xff] %v572
      %605 = vst [vmem:[#allocation3 + $0xb8] sm:$0xff] %v573
      %606 = vst [vmem:[#allocation3 + $0xc0] sm:$0xff] %v574
      %607 = vst [vmem:[#allocation3 + $0xc8] sm:$0xff] %v575
      %608 = vst [vmem:[#allocation3 + $0xd0] sm:$0xff] %v576
      %609 = vst [vmem:[#allocation3 + $0xd8] sm:$0xff] %v577
      %610 = vst [vmem:[#allocation3 + $0xe0] sm:$0xff] %v578
      %611 = vst [vmem:[#allocation3 + $0xe8] sm:$0xff] %v579
      %612 = vst [vmem:[#allocation3 + $0xf0] sm:$0xff] %v580
      %613 = vst [vmem:[#allocation3 + $0xf8] sm:$0xff] %v581
    $region17: #{tpu_custom_call.1} parent=1 // pred_fallthru
      _
    // Predicated region
    $region18: #{tpu_custom_call.1} parent=1 // pred_check
      _
    $region19: #{tpu_custom_call.1} parent=1 // pred_check_branch
      %615 = sbr.rel (0) target = $region21
    $region20: #{tpu_custom_call.1} parent=1 // pred_region
      %s617 = ssub.s32 4096, 4096
      %618 = vsyncadd [#allocation4], %s617
      %s619 = sshll.u32 [#allocation3], 4
      %s620 = int_to_ptr.vmem [resolvable:$true] %s619
      %625 = dma.vmem_to_hbm [thread:$0]  %s620, 4096, %s2, [#allocation4], 256, 256, 16
    $region21: #{tpu_custom_call.1} parent=1 // pred_fallthru
      _
    // Predicated region
    $region22: #{tpu_custom_call.1} parent=1 // pred_check
      _
    $region23: #{tpu_custom_call.1} parent=1 // pred_check_branch
      %627 = sbr.rel (0) target = $region25
    $region24: #{tpu_custom_call.1} parent=1 // pred_region
      %628 = dma.done [#allocation4], 4096
    $region25: #{tpu_custom_call.1} parent=1 // pred_fallthru
      _
    %629 = vsyncpa [#allocation4], 1

</llo_original>
